<compile_context>
chip_gen: v5e
topology: v5e:2x2
jax: 0.10.0
libtpu: 0.0.40
codegen_flags: <defaults>
</compile_context>

<pallas_src>
import jax
import jax.numpy as jnp
from jax import lax
from jax.experimental import pallas as pl
from jax.experimental.pallas import tpu as pltpu

IN_DIM = 8
NUM_ACTIONS = 4
OUT_WIDTH = 128  # lane-dense combined output: [value | probs(4) | zero pad]


def actor_critic_kernel(x_ref, w1_ref, b1_ref, wh_ref, bh_ref, wo_ref, bo_ref,
                        out_ref):
    x = x_ref[...]                                                    # (tb, 8)

    # shared_net: Linear(8, H) + ReLU
    h = jnp.dot(x, w1_ref[...], preferred_element_type=jnp.float32) + b1_ref[...]
    h = jnp.maximum(h, 0.0)                                           # (tb, H)

    # fused actor/critic hidden layer: Linear(H, 2H) + ReLU (wa1 | wc1)
    h2 = jnp.dot(h, wh_ref[...], preferred_element_type=jnp.float32) + bh_ref[...]
    h2 = jnp.maximum(h2, 0.0)                                         # (tb, 2H)

    # fused block-diagonal output layer: lane 0 = value, lanes 1..A = logits,
    # remaining lanes have zero weight/bias (padding).
    out = jnp.dot(h2, wo_ref[...], preferred_element_type=jnp.float32) + bo_ref[...]

    lane = lax.broadcasted_iota(jnp.int32, out.shape, 1)              # (tb, 128)
    is_logit = (lane >= 1) & (lane <= NUM_ACTIONS)

    # softmax over the logit lanes only (full-vreg ops, no slicing)
    masked = jnp.where(is_logit, out, -jnp.inf)
    m = jnp.max(masked, axis=-1, keepdims=True)
    shifted = jnp.where(is_logit, out - m, -jnp.inf)
    e = jnp.exp(shifted)                                              # 0 off-logit
    denom = jnp.sum(e, axis=-1, keepdims=True)
    probs = e * pl.reciprocal(denom, approx=True)

    # lane-dense combined write: value in lane 0, probs in lanes 1..A, 0 elsewhere
    out_ref[...] = jnp.where(lane == 0, out, probs)


def actor_critic_forward(state, fused):
    """Returns (value (B,1), action_probs (B,NUM_ACTIONS)) via one Pallas call."""
    B = state.shape[0]
    H = fused["w1"].shape[1]
    tile_b = B if B <= 128 else 128
    assert B % tile_b == 0, "batch must be a multiple of the batch tile"
    grid = (B // tile_b,)

    def wspec(shape):
        # constant index_map: weights stay VMEM-resident across grid steps
        return pl.BlockSpec(shape, lambda i: (0, 0))

    combined = pl.pallas_call(
        actor_critic_kernel,
        out_shape=jax.ShapeDtypeStruct((B, OUT_WIDTH), jnp.float32),
        grid_spec=pltpu.PrefetchScalarGridSpec(
            num_scalar_prefetch=0,
            grid=grid,
            in_specs=[
                pl.BlockSpec((tile_b, IN_DIM), lambda i: (i, 0)),
                wspec((IN_DIM, H)),
                wspec((1, H)),
                wspec((H, 2 * H)),
                wspec((1, 2 * H)),
                wspec((2 * H, OUT_WIDTH)),
                wspec((1, OUT_WIDTH)),
            ],
            out_specs=pl.BlockSpec((tile_b, OUT_WIDTH), lambda i: (i, 0)),
        ),
        compiler_params=pltpu.CompilerParams(
            dimension_semantics=("parallel",)),  # v7x: both TCs when batched
    )(state, fused["w1"], fused["b1"], fused["wh"], fused["bh"],
      fused["wo"], fused["bo"])

    value = combined[:, 0:1]
    probs = combined[:, 1:1 + NUM_ACTIONS]
    return value, probs


def init_params(key, hidden_dim=64, in_dim=IN_DIM, num_actions=NUM_ACTIONS):
    """Deterministic PyTorch-style (uniform +-1/sqrt(fan_in)) init."""
    def linear(key, fan_in, fan_out):
        kw, kb = jax.random.split(key)
        bound = 1.0 / jnp.sqrt(fan_in)
        w = jax.random.uniform(kw, (fan_in, fan_out), jnp.float32, -bound, bound)
        b = jax.random.uniform(kb, (1, fan_out), jnp.float32, -bound, bound)
        return w, b

    keys = jax.random.split(key, 5)
    w1, b1 = linear(keys[0], in_dim, hidden_dim)
    wa1, ba1 = linear(keys[1], hidden_dim, hidden_dim)
    wa2, ba2 = linear(keys[2], hidden_dim, num_actions)
    wc1, bc1 = linear(keys[3], hidden_dim, hidden_dim)
    wc2, bc2 = linear(keys[4], hidden_dim, 1)
    return dict(w1=w1, b1=b1, wa1=wa1, ba1=ba1, wa2=wa2, ba2=ba2,
                wc1=wc1, bc1=bc1, wc2=wc2, bc2=bc2)


def fuse_params(p, num_actions=NUM_ACTIONS, out_width=OUT_WIDTH):
    """One-time weight prep: fuse actor/critic heads into lane-dense matmuls."""
    H = p["w1"].shape[1]
    wh = jnp.concatenate([p["wa1"], p["wc1"]], axis=1)          # (H, 2H)
    bh = jnp.concatenate([p["ba1"], p["bc1"]], axis=1)          # (1, 2H)
    wo = jnp.zeros((2 * H, out_width), jnp.float32)
    wo = wo.at[:H, 1:1 + num_actions].set(p["wa2"])             # actor logits
    wo = wo.at[H:, 0:1].set(p["wc2"])                           # critic value
    bo = jnp.zeros((1, out_width), jnp.float32)
    bo = bo.at[0, 0].set(p["bc2"][0, 0])
    bo = bo.at[0, 1:1 + num_actions].set(p["ba2"][0])
    return dict(w1=p["w1"], b1=p["b1"], wh=wh, bh=bh, wo=wo, bo=bo)


@jax.jit
def actor_critic_step(state, fused, sample_key):
    """ActorCritic.forward semantics, fully on-device: (value, action, log_prob).

    Note: action.item() (host sync) is intentionally NOT done here; convert
    with int(action) outside the hot path, mirroring the PyTorch .item().
    """
    value, probs = actor_critic_forward(state, fused)
    p = probs[0]
    logits = jnp.log(p)
    action = jax.random.categorical(sample_key, logits)
    # normalize like torch.distributions.Categorical(probs=...) (approx recip
    # means probs sum to ~1 within ~1e-3, so this is a tiny correction)
    log_prob = jnp.log(p[action]) - jnp.log(jnp.sum(p))
    return value, action, log_prob


def reference_forward(state, p):
    """Pure-JAX reference matching the PyTorch module (unfused weights)."""
    h = jax.nn.relu(state @ p["w1"] + p["b1"])
    ha = jax.nn.relu(h @ p["wa1"] + p["ba1"])
    probs = jax.nn.softmax(ha @ p["wa2"] + p["ba2"], axis=-1)
    hc = jax.nn.relu(h @ p["wc1"] + p["bc1"])
    value = hc @ p["wc2"] + p["bc2"]
    return value, probs


if __name__ == "__main__":
    key = jax.random.PRNGKey(0)
    k_param, k_state, k_sample, k_batch = jax.random.split(key, 4)

    hidden_dim = 64
    params = init_params(k_param, hidden_dim=hidden_dim)
    fused = fuse_params(params)

    # batch = 1 (forward returns action.item(), which implies a single state)
    state = jax.random.normal(k_state, (1, IN_DIM), dtype=jnp.float32)
    value, action, log_prob = actor_critic_step(state, fused, k_sample)
    jax.block_until_ready((value, action, log_prob))

    # correctness check against the pure-JAX reference (approx recip ~1e-3)
    v_ref, p_ref = reference_forward(state, params)
    v_k, p_k = actor_critic_forward(state, fused)
    assert jnp.allclose(v_k, v_ref, rtol=2e-3, atol=2e-3)
    assert jnp.allclose(p_k, p_ref, rtol=2e-3, atol=2e-3)

    # batched throughput path: grid over batch tiles, both TCs on v7x
    big_state = jax.random.normal(k_batch, (256, IN_DIM), dtype=jnp.float32)
    v_b, p_b = jax.jit(actor_critic_forward)(big_state, fused)
    jax.block_until_ready((v_b, p_b))
    v_rb, p_rb = reference_forward(big_state, params)
    assert jnp.allclose(v_b, v_rb, rtol=2e-3, atol=2e-3)
    assert jnp.allclose(p_b, p_rb, rtol=2e-3, atol=2e-3)

    # host sync (.item() equivalent) only outside the device hot path
    action_int = int(action)
    assert value.shape == (1, 1)
    assert 0 <= action_int < NUM_ACTIONS
    assert log_prob.shape == ()

    print("KERNEL_OK")
</pallas_src>

<mosaic_0001>
module attributes {stable_mosaic.version = 11 : i64} {
  func.func @actor_critic_kernel(%arg0: i32, %arg1: memref<1x8xf32, #tpu.memory_space<vmem>>, %arg2: memref<8x64xf32, #tpu.memory_space<vmem>>, %arg3: memref<1x64xf32, #tpu.memory_space<vmem>>, %arg4: memref<64x128xf32, #tpu.memory_space<vmem>>, %arg5: memref<1x128xf32, #tpu.memory_space<vmem>>, %arg6: memref<128x128xf32, #tpu.memory_space<vmem>>, %arg7: memref<1x128xf32, #tpu.memory_space<vmem>>, %arg8: memref<1x128xf32, #tpu.memory_space<vmem>>) attributes {dimension_semantics = [#tpu.dimension_semantics<parallel>], iteration_bounds = array<i64: 1>, scalar_prefetch = 0 : i64, scratch_operands = 0 : i64, tpu.core_type = #tpu.core_type<tc>, window_params = [{transform_indices = @transform_0, window_bounds = array<i64: 1, 8>}, {pipeline_mode = #tpu.pipeline_mode<synchronous>, transform_indices = @transform_1, window_bounds = array<i64: 8, 64>}, {pipeline_mode = #tpu.pipeline_mode<synchronous>, transform_indices = @transform_2, window_bounds = array<i64: 1, 64>}, {pipeline_mode = #tpu.pipeline_mode<synchronous>, transform_indices = @transform_3, window_bounds = array<i64: 64, 128>}, {pipeline_mode = #tpu.pipeline_mode<synchronous>, transform_indices = @transform_4, window_bounds = array<i64: 1, 128>}, {pipeline_mode = #tpu.pipeline_mode<synchronous>, transform_indices = @transform_5, window_bounds = array<i64: 128, 128>}, {pipeline_mode = #tpu.pipeline_mode<synchronous>, transform_indices = @transform_6, window_bounds = array<i64: 1, 128>}, {transform_indices = @transform_7, window_bounds = array<i64: 1, 128>}]} {
    %c0 = arith.constant 0 : index
    %c0_0 = arith.constant 0 : index
    %0 = vector.load %arg1[%c0, %c0_0] : memref<1x8xf32, #tpu.memory_space<vmem>>, vector<1x8xf32>
    %c0_1 = arith.constant 0 : index
    %c0_2 = arith.constant 0 : index
    %1 = vector.load %arg2[%c0_1, %c0_2] : memref<8x64xf32, #tpu.memory_space<vmem>>, vector<8x64xf32>
    %cst = arith.constant dense<0.000000e+00> : vector<1x64xf32>
    %2 = tpu.matmul %0, %1, %cst {dimension_numbers = #tpu.dot_dimension_numbers<[1], [0], [0], [1], [0, 0, 1, 1], [], []>} : vector<1x8xf32>, vector<8x64xf32>, vector<1x64xf32> -> vector<1x64xf32>
    %c0_3 = arith.constant 0 : index
    %c0_4 = arith.constant 0 : index
    %3 = vector.load %arg3[%c0_3, %c0_4] : memref<1x64xf32, #tpu.memory_space<vmem>>, vector<1x64xf32>
    %4 = arith.addf %2, %3 : vector<1x64xf32>
    %cst_5 = arith.constant 0.000000e+00 : f32
    %5 = vector.broadcast %cst_5 : f32 to vector<1x64xf32>
    %6 = arith.maximumf %4, %5 : vector<1x64xf32>
    %c0_6 = arith.constant 0 : index
    %c0_7 = arith.constant 0 : index
    %7 = vector.load %arg4[%c0_6, %c0_7] : memref<64x128xf32, #tpu.memory_space<vmem>>, vector<64x128xf32>
    %cst_8 = arith.constant dense<0.000000e+00> : vector<1x128xf32>
    %8 = tpu.matmul %6, %7, %cst_8 {dimension_numbers = #tpu.dot_dimension_numbers<[1], [0], [0], [1], [0, 0, 1, 1], [], []>} : vector<1x64xf32>, vector<64x128xf32>, vector<1x128xf32> -> vector<1x128xf32>
    %c0_9 = arith.constant 0 : index
    %c0_10 = arith.constant 0 : index
    %9 = vector.load %arg5[%c0_9, %c0_10] : memref<1x128xf32, #tpu.memory_space<vmem>>, vector<1x128xf32>
    %10 = arith.addf %8, %9 : vector<1x128xf32>
    %cst_11 = arith.constant 0.000000e+00 : f32
    %11 = vector.broadcast %cst_11 : f32 to vector<1x128xf32>
    %12 = arith.maximumf %10, %11 : vector<1x128xf32>
    %c0_12 = arith.constant 0 : index
    %c0_13 = arith.constant 0 : index
    %13 = vector.load %arg6[%c0_12, %c0_13] : memref<128x128xf32, #tpu.memory_space<vmem>>, vector<128x128xf32>
    %cst_14 = arith.constant dense<0.000000e+00> : vector<1x128xf32>
    %14 = tpu.matmul %12, %13, %cst_14 {dimension_numbers = #tpu.dot_dimension_numbers<[1], [0], [0], [1], [0, 0, 1, 1], [], []>} : vector<1x128xf32>, vector<128x128xf32>, vector<1x128xf32> -> vector<1x128xf32>
    %c0_15 = arith.constant 0 : index
    %c0_16 = arith.constant 0 : index
    %15 = vector.load %arg7[%c0_15, %c0_16] : memref<1x128xf32, #tpu.memory_space<vmem>>, vector<1x128xf32>
    %16 = arith.addf %14, %15 : vector<1x128xf32>
    %17 = tpu.iota {dimensions = array<i32: 1>} : vector<1x128xi32>
    %c1_i32 = arith.constant 1 : i32
    %18 = vector.broadcast %c1_i32 : i32 to vector<1x128xi32>
    %19 = arith.cmpi sge, %17, %18 : vector<1x128xi32>
    %c4_i32 = arith.constant 4 : i32
    %20 = vector.broadcast %c4_i32 : i32 to vector<1x128xi32>
    %21 = arith.cmpi sle, %17, %20 : vector<1x128xi32>
    %22 = arith.andi %19, %21 : vector<1x128xi1>
    %cst_17 = arith.constant 0xFF800000 : f32
    %23 = vector.broadcast %cst_17 : f32 to vector<1x128xf32>
    %24 = arith.select %22, %16, %23 : vector<1x128xi1>, vector<1x128xf32>
    %cst_18 = arith.constant dense<0xFF800000> : vector<1xf32>
    %25 = vector.multi_reduction <maximumf>, %24, %cst_18 [1] : vector<1x128xf32> to vector<1xf32>
    %26 = vector.shape_cast %25 : vector<1xf32> to vector<1x1xf32>
    %27 = vector.broadcast %26 : vector<1x1xf32> to vector<1x128xf32>
    %28 = arith.subf %16, %27 : vector<1x128xf32>
    %cst_19 = arith.constant 0xFF800000 : f32
    %29 = vector.broadcast %cst_19 : f32 to vector<1x128xf32>
    %30 = arith.select %22, %28, %29 : vector<1x128xi1>, vector<1x128xf32>
    %31 = math.exp %30 : vector<1x128xf32>
    %cst_20 = arith.constant dense<0.000000e+00> : vector<1xf32>
    %32 = vector.multi_reduction <add>, %31, %cst_20 [1] : vector<1x128xf32> to vector<1xf32>
    %33 = vector.shape_cast %32 : vector<1xf32> to vector<1x1xf32>
    %34 = tpu.reciprocal %33 {approx = true} : vector<1x1xf32> -> vector<1x1xf32>
    %35 = vector.broadcast %34 : vector<1x1xf32> to vector<1x128xf32>
    %36 = arith.mulf %31, %35 : vector<1x128xf32>
    %c0_i32 = arith.constant 0 : i32
    %37 = vector.broadcast %c0_i32 : i32 to vector<1x128xi32>
    %38 = arith.cmpi eq, %17, %37 : vector<1x128xi32>
    %39 = arith.select %38, %16, %36 : vector<1x128xi1>, vector<1x128xf32>
    %c0_21 = arith.constant 0 : index
    %c0_22 = arith.constant 0 : index
    %40 = vector.load %arg8[%c0_21, %c0_22] : memref<1x128xf32, #tpu.memory_space<vmem>>, vector<1x128xf32>
    tpu.vector_store %arg8[%c0_21, %c0_22], %39 {strides = array<i32>} : memref<1x128xf32, #tpu.memory_space<vmem>>, vector<1x128xf32>,
    return
  }
  func.func @transform_0(%arg0: i32) -> (i32, i32) {
    %c0_i32 = arith.constant 0 : i32
    %c0_i32_0 = arith.constant 0 : i32
    return %arg0, %c0_i32 : i32, i32
  }
  func.func @transform_1(%arg0: i32) -> (i32, i32) {
    %c0_i32 = arith.constant 0 : i32
    %c0_i32_0 = arith.constant 0 : i32
    %c0_i32_1 = arith.constant 0 : i32
    return %c0_i32, %c0_i32_0 : i32, i32
  }
  func.func @transform_2(%arg0: i32) -> (i32, i32) {
    %c0_i32 = arith.constant 0 : i32
    %c0_i32_0 = arith.constant 0 : i32
    %c0_i32_1 = arith.constant 0 : i32
    return %c0_i32, %c0_i32_0 : i32, i32
  }
  func.func @transform_3(%arg0: i32) -> (i32, i32) {
    %c0_i32 = arith.constant 0 : i32
    %c0_i32_0 = arith.constant 0 : i32
    %c0_i32_1 = arith.constant 0 : i32
    return %c0_i32, %c0_i32_0 : i32, i32
  }
  func.func @transform_4(%arg0: i32) -> (i32, i32) {
    %c0_i32 = arith.constant 0 : i32
    %c0_i32_0 = arith.constant 0 : i32
    %c0_i32_1 = arith.constant 0 : i32
    return %c0_i32, %c0_i32_0 : i32, i32
  }
  func.func @transform_5(%arg0: i32) -> (i32, i32) {
    %c0_i32 = arith.constant 0 : i32
    %c0_i32_0 = arith.constant 0 : i32
    %c0_i32_1 = arith.constant 0 : i32
    return %c0_i32, %c0_i32_0 : i32, i32
  }
  func.func @transform_6(%arg0: i32) -> (i32, i32) {
    %c0_i32 = arith.constant 0 : i32
    %c0_i32_0 = arith.constant 0 : i32
    %c0_i32_1 = arith.constant 0 : i32
    return %c0_i32, %c0_i32_0 : i32, i32
  }
  func.func @transform_7(%arg0: i32) -> (i32, i32) {
    %c0_i32 = arith.constant 0 : i32
    %c0_i32_0 = arith.constant 0 : i32
    return %arg0, %c0_i32 : i32, i32
  }
}

</mosaic_0001>

<llo_original>
// kernel: actor_critic_step.1
$region0: #{actor_critic_step.1}
  #allocation0 [shape = 'u32[]', space=smem, size = 0x4, offset = 0x4, fixed_abs, tag = 'smem constant byte address 0x4 - core index']
  #allocation1 [shape = 'u32[72,128]{1,0:T(1,128)}', space=vmem, size = 0x9000, scoped, tag = 'internal scratch']
  %s0 = inlined_call_operand.vmem [shape: f32[1,8], index: 0, kind: input, shape index: {}]
  %s1 = inlined_call_operand.vmem [shape: f32[8,64], index: 1, kind: input, shape index: {}]
  %s2 = inlined_call_operand.vmem [shape: f32[1,64], index: 2, kind: input, shape index: {}]
  %s3 = inlined_call_operand.hbm [shape: f32[64,128], index: 3, kind: input, shape index: {}]
  %s4 = inlined_call_operand.vmem [shape: f32[1,128], index: 4, kind: input, shape index: {}]
  %s5 = inlined_call_operand.hbm [shape: f32[128,128], index: 5, kind: input, shape index: {}]
  %s6 = inlined_call_operand.vmem [shape: f32[1,128], index: 6, kind: input, shape index: {}]
  %s7 = inlined_call_operand.vmem [shape: f32[1,128], index: 7, kind: output, shape index: {}]
  %s8 = sld [smem:[#allocation0]]
  $region46: #{actor_critic_step.1} parent=0
    _
  %s10 = ssub.s32 1, %s8
  %s11 = scalar_select 0, %s10, %s8
  $region1: #{actor_critic_step.1} parent=0
    #allocation2 [shape = 'u8[32768]{0}', space=vmem, size = 0x8000, scoped, tag = 'input window, operand 3, single buffered']
    #allocation3 [shape = 's32[1]{0}', space=sflag, size = 0x4, scoped, tag = 'scoped memory for actor_critic_step.1']
    #allocation4 [shape = 'u8[65536]{0}', space=vmem, size = 0x10000, scoped, tag = 'input window, operand 5, single buffered']
    #allocation5 [shape = 's32[1]{0}', space=sflag, size = 0x4, scoped, tag = 'scoped memory for actor_critic_step.1']
    %12 = vsyncpa [#allocation3], 0
    %13 = vsyncpa [#allocation5], 0
    // Predicated region
    $region2: #{actor_critic_step.1} parent=1 // pred_check
      _
    $region3: #{actor_critic_step.1} parent=1 // pred_check_branch
      %15 = sbr.rel (0) target = $region5
    $region4: #{actor_critic_step.1} parent=1 // pred_region
      _
    $region5: #{actor_critic_step.1} parent=1 // pred_fallthru
      _
    // Predicated region
    $region6: #{actor_critic_step.1} parent=1 // pred_check
      _
    $region7: #{actor_critic_step.1} parent=1 // pred_check_branch
      %17 = sbr.rel (0) target = $region9
    $region8: #{actor_critic_step.1} parent=1 // pred_region
      _
    $region9: #{actor_critic_step.1} parent=1 // pred_fallthru
      _
    // Predicated region
    $region10: #{actor_critic_step.1} parent=1 // pred_check
      _
    $region11: #{actor_critic_step.1} parent=1 // pred_check_branch
      %19 = sbr.rel (0) target = $region13
    $region12: #{actor_critic_step.1} parent=1 // pred_region
      _
    $region13: #{actor_critic_step.1} parent=1 // pred_fallthru
      _
    // Predicated region
    $region14: #{actor_critic_step.1} parent=1 // pred_check
      _
    $region15: #{actor_critic_step.1} parent=1 // pred_check_branch
      %21 = sbr.rel (0) target = $region17
    $region16: #{actor_critic_step.1} parent=1 // pred_region
      %23 = vsyncadd [#allocation3], 0
      %s24 = sshll.u32 %s3, 4
      %s25 = int_to_ptr.hbm [resolvable:$true] %s24
      %s26 = sshll.u32 [#allocation2], 4
      %s27 = int_to_ptr.vmem [resolvable:$true] %s26
      %32 = dma.hbm_to_vmem [thread:$0]  %s25, 1024, %s27, [#allocation3], 128, 128, 8
    $region17: #{actor_critic_step.1} parent=1 // pred_fallthru
      _
    // Predicated region
    $region18: #{actor_critic_step.1} parent=1 // pred_check
      _
    $region19: #{actor_critic_step.1} parent=1 // pred_check_branch
      %34 = sbr.rel (0) target = $region21
    $region20: #{actor_critic_step.1} parent=1 // pred_region
      _
    $region21: #{actor_critic_step.1} parent=1 // pred_fallthru
      _
    // Predicated region
    $region22: #{actor_critic_step.1} parent=1 // pred_check
      _
    $region23: #{actor_critic_step.1} parent=1 // pred_check_branch
      %36 = sbr.rel (0) target = $region25
    $region24: #{actor_critic_step.1} parent=1 // pred_region
      %38 = vsyncadd [#allocation5], 0
      %s39 = sshll.u32 %s5, 4
      %s40 = int_to_ptr.hbm [resolvable:$true] %s39
      %s41 = sshll.u32 [#allocation4], 4
      %s42 = int_to_ptr.vmem [resolvable:$true] %s41
      %47 = dma.hbm_to_vmem [thread:$0]  %s40, 2048, %s42, [#allocation5], 128, 128, 8
    $region25: #{actor_critic_step.1} parent=1 // pred_fallthru
      _
    // Predicated region
    $region26: #{actor_critic_step.1} parent=1 // pred_check
      _
    $region27: #{actor_critic_step.1} parent=1 // pred_check_branch
      %49 = sbr.rel (0) target = $region29
    $region28: #{actor_critic_step.1} parent=1 // pred_region
      _
    $region29: #{actor_critic_step.1} parent=1 // pred_fallthru
      _
    // Predicated region
    $region30: #{actor_critic_step.1} parent=1 // pred_check
      _
    $region31: #{actor_critic_step.1} parent=1 // pred_check_branch
      %51 = sbr.rel (0) target = $region33
    $region32: #{actor_critic_step.1} parent=1 // pred_region
      %53 = dma.done [#allocation3], 1024
    $region33: #{actor_critic_step.1} parent=1 // pred_fallthru
      _
    // Predicated region
    $region34: #{actor_critic_step.1} parent=1 // pred_check
      _
    $region35: #{actor_critic_step.1} parent=1 // pred_check_branch
      %55 = sbr.rel (0) target = $region37
    $region36: #{actor_critic_step.1} parent=1 // pred_region
      %57 = dma.done [#allocation5], 2048
    $region37: #{actor_critic_step.1} parent=1 // pred_fallthru
      _
    %v58 = vld [vmem:[%s0] sm:$0x1]
    %v59 = vld [vmem:[%s1] sm:$0xff]
    %v60 = vld [vmem:[%s2] sm:$0x1]
    %vm61 = vcmask 64512
    %v63 = vsel %vm61, %v58, 0
    %65 = vmatpush.msra.mxu0 0.0
    %66 = vmatpush.msra.mxu0 0.0
    %67 = vmatpush.msra.mxu0 0.0
    %68 = vmatpush.msra.mxu0 0.0
    %69 = vmatpush.msra.mxu0 0.0
    %70 = vmatpush.msra.mxu0 0.0
    %71 = vmatpush.msra.mxu0 0.0
    %72 = vmatpush.msra.mxu0 0.0
    %73 = vmatpush.msra.mxu0 0.0
    %74 = vmatpush.msra.mxu0 0.0
    %75 = vmatpush.msra.mxu0 0.0
    %76 = vmatpush.msra.mxu0 0.0
    %77 = vmatpush.msra.mxu0 0.0
    %78 = vmatpush.msra.mxu0 0.0
    %79 = vmatpush.msra.mxu0 0.0
    %80 = vmatpush.msra.mxu0 %v59
    %81 = vmatmul.f32.gmra.mxu0 %v63
    %v82 = vpop.f32.mrf.mxu0
    %v83 = vadd.f32 %v60, %v82
    %84 = vdwg.mxu0
    %v85 = vmax.f32 %v83, 0.0
    %v86 = vld [vmem:[#allocation2] sm:$0xff]
    %v87 = vld [vmem:[#allocation2 + $0x8] sm:$0xff]
    %v88 = vld [vmem:[#allocation2 + $0x10] sm:$0xff]
    %v89 = vld [vmem:[#allocation2 + $0x18] sm:$0xff]
    %v90 = vld [vmem:[#allocation2 + $0x20] sm:$0xff]
    %v91 = vld [vmem:[#allocation2 + $0x28] sm:$0xff]
    %v92 = vld [vmem:[#allocation2 + $0x30] sm:$0xff]
    %v93 = vld [vmem:[#allocation2 + $0x38] sm:$0xff]
    %v94 = vld [vmem:[%s4] sm:$0x1]
    %vm95 = vcmask 523264
    %v97 = vsel %vm95, %v85, 0
    %99 = vmatpush.msra.mxu0 0.0
    %100 = vmatpush.msra.mxu0 0.0
    %101 = vmatpush.msra.mxu0 0.0
    %102 = vmatpush.msra.mxu0 0.0
    %103 = vmatpush.msra.mxu0 0.0
    %104 = vmatpush.msra.mxu0 0.0
    %105 = vmatpush.msra.mxu0 0.0
    %106 = vmatpush.msra.mxu0 0.0
    %107 = vmatpush.msra.mxu0 %v93
    %108 = vmatpush.msra.mxu0 %v92
    %109 = vmatpush.msra.mxu0 %v91
    %110 = vmatpush.msra.mxu0 %v90
    %111 = vmatpush.msra.mxu0 %v89
    %112 = vmatpush.msra.mxu0 %v88
    %113 = vmatpush.msra.mxu0 %v87
    %114 = vmatpush.msra.mxu0 %v86
    %115 = vmatmul.f32.gmra.mxu0 %v97
    %v116 = vpop.f32.mrf.mxu0
    %v117 = vadd.f32 %v94, %v116
    %118 = vdwg.mxu0
    %v119 = vmax.f32 %v117, 0.0
    %v120 = vld [vmem:[#allocation4] sm:$0xff]
    %v121 = vld [vmem:[#allocation4 + $0x8] sm:$0xff]
    %v122 = vld [vmem:[#allocation4 + $0x10] sm:$0xff]
    %v123 = vld [vmem:[#allocation4 + $0x18] sm:$0xff]
    %v124 = vld [vmem:[#allocation4 + $0x20] sm:$0xff]
    %v125 = vld [vmem:[#allocation4 + $0x28] sm:$0xff]
    %v126 = vld [vmem:[#allocation4 + $0x30] sm:$0xff]
    %v127 = vld [vmem:[#allocation4 + $0x38] sm:$0xff]
    %v128 = vld [vmem:[#allocation4 + $0x40] sm:$0xff]
    %v129 = vld [vmem:[#allocation4 + $0x48] sm:$0xff]
    %v130 = vld [vmem:[#allocation4 + $0x50] sm:$0xff]
    %v131 = vld [vmem:[#allocation4 + $0x58] sm:$0xff]
    %v132 = vld [vmem:[#allocation4 + $0x60] sm:$0xff]
    %v133 = vld [vmem:[#allocation4 + $0x68] sm:$0xff]
    %v134 = vld [vmem:[#allocation4 + $0x70] sm:$0xff]
    %v135 = vld [vmem:[#allocation4 + $0x78] sm:$0xff]
    %v136 = vld [vmem:[%s6] sm:$0x1]
    %137 = vmatpush.msra.mxu0 %v135
    %138 = vmatpush.msra.mxu0 %v134
    %139 = vmatpush.msra.mxu0 %v133
    %140 = vmatpush.msra.mxu0 %v132
    %141 = vmatpush.msra.mxu0 %v131
    %142 = vmatpush.msra.mxu0 %v130
    %143 = vmatpush.msra.mxu0 %v129
    %144 = vmatpush.msra.mxu0 %v128
    %145 = vmatpush.msra.mxu0 %v127
    %146 = vmatpush.msra.mxu0 %v126
    %147 = vmatpush.msra.mxu0 %v125
    %148 = vmatpush.msra.mxu0 %v124
    %149 = vmatpush.msra.mxu0 %v123
    %150 = vmatpush.msra.mxu0 %v122
    %151 = vmatpush.msra.mxu0 %v121
    %152 = vmatpush.msra.mxu0 %v120
    %153 = vmatmul.f32.gmra.mxu0 %v119
    %v154 = vpop.f32.mrf.mxu0
    %v155 = vadd.f32 %v136, %v154
    %156 = vdwg.mxu0
    %v157 = vlaneseq
    %v158 = vand.u32 %v157, 127
    %vm159 = vcmp.ge.s32.totalorder %v158, 1
    %vm160 = vcmp.le.s32.totalorder %v158, 4
    %vm161 = vmand %vm159, %vm160
    %v162 = vsel %vm161, %v155, -inf
    %vm163 = vcmask 1040384
    %v164 = vsel %vm163, %v162, -inf
    %165 = vmax.xlane.f32.xlu0 %v164
    %v166 = vpop.xlane.xlu0 %165
    %v167 = vsub.f32 %v155, %v166
    %v168 = vsel %vm161, %v167, -inf
    %v169 = vmul.f32 %v168, 1.442695
    %v170 = vpow.pop %v169
    %v171 = vsel %vm163, %v170, 0.0
    %172 = vadd.xlane.f32.xlu0 %v171
    %v173 = vpop.xlane.xlu0 %172
    %v174 = vrcp.pop %v173
    %v175 = vmul.f32 %v170, %v174
    %vm176 = vcmp.eq.s32.totalorder %v158, 0
    %v177 = vsel %vm176, %v155, %v175
    %178 = vst [vmem:[%s7] sm:$0x1] %v177
    // Predicated region
    $region38: #{actor_critic_step.1} parent=1 // pred_check
      _
    $region39: #{actor_critic_step.1} parent=1 // pred_check_branch
      %180 = sbr.rel (0) target = $region41
    $region40: #{actor_critic_step.1} parent=1 // pred_region
      _
    $region41: #{actor_critic_step.1} parent=1 // pred_fallthru
      _
    // Predicated region
    $region42: #{actor_critic_step.1} parent=1 // pred_check
      _
    $region43: #{actor_critic_step.1} parent=1 // pred_check_branch
      %182 = sbr.rel (0) target = $region45
    $region44: #{actor_critic_step.1} parent=1 // pred_region
      _
    $region45: #{actor_critic_step.1} parent=1 // pred_fallthru
      _
    %183 = vsyncpa [#allocation3], 1
    %184 = vsyncpa [#allocation5], 1

</llo_original>
